<compile_context>
chip_gen: v7x
topology: tpu7x:2x2x1
jax: 0.10.0
libtpu: 0.0.40
codegen_flags: <defaults>
</compile_context>

<pallas_src>
import jax
import jax.numpy as jnp
from jax.experimental import pallas as pl
from jax.experimental.pallas import tpu as pltpu

EPS = 1e-5
NUM_GROUPS = 2


def _group_norm_kernel(x_ref, gamma_ref, beta_ref, o_ref):
    # x_ref block:      (1, 1, Cg, H*W)   -- one (group, sample) tile, lane-dense
    # gamma/beta block: (1, Cg, 1)        -- per-channel affine params (resident
    #                                         across the inner N grid axis)
    x32 = x_ref[...].astype(jnp.float32)
    n_elems = x32.size  # static: Cg * H * W

    # Fused single-pass statistics (f32 accumulation).
    s = jnp.sum(x32)
    s2 = jnp.sum(x32 * x32)
    mean = s / n_elems
    var = s2 / n_elems - mean * mean
    inv_std = jax.lax.rsqrt(var + EPS)

    gamma = gamma_ref[...].astype(jnp.float32)          # (1, Cg, 1)
    beta = beta_ref[...].astype(jnp.float32)             # (1, Cg, 1)
    scale = gamma * inv_std                               # (1, Cg, 1)
    shift = beta - mean * scale                           # (1, Cg, 1)

    # One FMA-style pass over the tile; broadcasts (1,Cg,1) over (1,1,Cg,HW).
    # (For bf16 inputs on v6e/v7x this elementwise step could run in bf16;
    #  kept in f32 here since stats are already f32 and inputs are f32.)
    o_ref[...] = (x32 * scale + shift).astype(o_ref.dtype)


def my_group_norm(x, gamma, beta, num_groups=NUM_GROUPS):
    """x: (N, C, H, W); gamma, beta: (C,). Returns (N, C, H, W)."""
    N, C, H, W = x.shape
    assert C % num_groups == 0
    Cg = C // num_groups
    HW = H * W

    # Lane-dense views (free reshapes for contiguous NCHW).
    x_g = x.reshape(N, num_groups, Cg, HW)
    gamma_g = gamma.reshape(num_groups, Cg, 1)
    beta_g = beta.reshape(num_groups, Cg, 1)

    # VMEM budget: in + out blocks, double-buffered, plus headroom.
    blk_bytes = Cg * HW * x.dtype.itemsize
    vmem_limit = int(min(max(2 * 2 * blk_bytes + (1 << 20), 16 << 20), 64 << 20))

    out = pl.pallas_call(
        _group_norm_kernel,
        out_shape=jax.ShapeDtypeStruct((N, num_groups, Cg, HW), x.dtype),
        grid_spec=pltpu.PrefetchScalarGridSpec(
            num_scalar_prefetch=0,
            # Group axis outermost so gamma/beta block index is constant
            # across the inner N loop (no redundant per-step DMA).
            grid=(num_groups, N),
            in_specs=[
                pl.BlockSpec((1, 1, Cg, HW), lambda g, n: (n, g, 0, 0)),
                pl.BlockSpec((1, Cg, 1), lambda g, n: (g, 0, 0)),
                pl.BlockSpec((1, Cg, 1), lambda g, n: (g, 0, 0)),
            ],
            out_specs=pl.BlockSpec((1, 1, Cg, HW), lambda g, n: (n, g, 0, 0)),
        ),
        compiler_params=pltpu.CompilerParams(
            dimension_semantics=("parallel", "parallel"),
            vmem_limit_bytes=vmem_limit,
        ),
    )(x_g, gamma_g, beta_g)

    return out.reshape(N, C, H, W)


def _reference_group_norm(x, gamma, beta, num_groups=NUM_GROUPS):
    N, C, H, W = x.shape
    Cg = C // num_groups
    xg = x.reshape(N, num_groups, Cg * H * W).astype(jnp.float32)
    mean = jnp.mean(xg, axis=-1, keepdims=True)
    var = jnp.mean((xg - mean) ** 2, axis=-1, keepdims=True)
    xn = (xg - mean) / jnp.sqrt(var + EPS)
    xn = xn.reshape(N, C, H, W)
    return xn * gamma.reshape(1, C, 1, 1) + beta.reshape(1, C, 1, 1)


if __name__ == "__main__":
    key = jax.random.PRNGKey(0)
    kx, kg, kb = jax.random.split(key, 3)

    N, C, H, W = 2, 4, 16, 16
    x = jax.random.normal(kx, (N, C, H, W), dtype=jnp.float32)
    # Non-trivial affine params so the scale/shift path is exercised
    # (PyTorch default init is weight=1, bias=0).
    gamma = 1.0 + 0.1 * jax.random.normal(kg, (C,), dtype=jnp.float32)
    beta = 0.1 * jax.random.normal(kb, (C,), dtype=jnp.float32)

    out = my_group_norm(x, gamma, beta)
    out = jax.block_until_ready(out)

    ref = _reference_group_norm(x, gamma, beta)
    assert out.shape == (N, C, H, W)
    assert jnp.allclose(out, ref, atol=1e-5, rtol=1e-5), "mismatch vs reference"

    print("KERNEL_OK")
</pallas_src>

<mosaic_0001>
module attributes {stable_mosaic.version = 11 : i64} {
  func.func @_group_norm_kernel(%arg0: i32, %arg1: i32, %arg2: memref<1x1x2x256xf32, #tpu.memory_space<vmem>>, %arg3: memref<1x2x1xf32, #tpu.memory_space<vmem>>, %arg4: memref<1x2x1xf32, #tpu.memory_space<vmem>>, %arg5: memref<1x1x2x256xf32, #tpu.memory_space<vmem>>) attributes {dimension_semantics = [#tpu.dimension_semantics<parallel>, #tpu.dimension_semantics<parallel>], iteration_bounds = array<i64: 2, 2>, scalar_prefetch = 0 : i64, scratch_operands = 0 : i64, tpu.core_type = #tpu.core_type<tc>, window_params = [{transform_indices = @transform_0, window_bounds = array<i64: 1, 1, 2, 256>}, {transform_indices = @transform_1, window_bounds = array<i64: 1, 2, 1>}, {transform_indices = @transform_2, window_bounds = array<i64: 1, 2, 1>}, {transform_indices = @transform_3, window_bounds = array<i64: 1, 1, 2, 256>}]} {
    %c0 = arith.constant 0 : index
    %c0_0 = arith.constant 0 : index
    %c0_1 = arith.constant 0 : index
    %c0_2 = arith.constant 0 : index
    %0 = vector.load %arg2[%c0, %c0_0, %c0_1, %c0_2] : memref<1x1x2x256xf32, #tpu.memory_space<vmem>>, vector<1x1x2x256xf32>
    %1 = vector.shape_cast %0 : vector<1x1x2x256xf32> to vector<1x1x1x2x256xf32>
    %cst = arith.constant dense<0.000000e+00> : vector<1xf32>
    %2 = vector.multi_reduction <add>, %1, %cst [1, 2, 3, 4] : vector<1x1x1x2x256xf32> to vector<1xf32>
    %3 = vector.shape_cast %2 : vector<1xf32> to vector<1x1x1x1x1xf32>
    %4 = vector.extract %3[0, 0, 0, 0, 0] : f32 from vector<1x1x1x1x1xf32>
    %5 = arith.mulf %0, %0 : vector<1x1x2x256xf32>
    %6 = vector.shape_cast %5 : vector<1x1x2x256xf32> to vector<1x1x1x2x256xf32>
    %cst_3 = arith.constant dense<0.000000e+00> : vector<1xf32>
    %7 = vector.multi_reduction <add>, %6, %cst_3 [1, 2, 3, 4] : vector<1x1x1x2x256xf32> to vector<1xf32>
    %8 = vector.shape_cast %7 : vector<1xf32> to vector<1x1x1x1x1xf32>
    %9 = vector.extract %8[0, 0, 0, 0, 0] : f32 from vector<1x1x1x1x1xf32>
    %cst_4 = arith.constant 5.120000e+02 : f32
    %10 = arith.divf %4, %cst_4 : f32
    %cst_5 = arith.constant 5.120000e+02 : f32
    %11 = arith.divf %9, %cst_5 : f32
    %12 = arith.mulf %10, %10 : f32
    %13 = arith.subf %11, %12 : f32
    %cst_6 = arith.constant 9.99999974E-6 : f32
    %14 = arith.addf %13, %cst_6 : f32
    %15 = math.rsqrt %14 : f32
    %c0_7 = arith.constant 0 : index
    %c0_8 = arith.constant 0 : index
    %c0_9 = arith.constant 0 : index
    %16 = vector.load %arg3[%c0_7, %c0_8, %c0_9] : memref<1x2x1xf32, #tpu.memory_space<vmem>>, vector<1x2x1xf32>
    %c0_10 = arith.constant 0 : index
    %c0_11 = arith.constant 0 : index
    %c0_12 = arith.constant 0 : index
    %17 = vector.load %arg4[%c0_10, %c0_11, %c0_12] : memref<1x2x1xf32, #tpu.memory_space<vmem>>, vector<1x2x1xf32>
    %18 = vector.broadcast %15 : f32 to vector<1x2x1xf32>
    %19 = arith.mulf %16, %18 : vector<1x2x1xf32>
    %20 = vector.broadcast %10 : f32 to vector<1x2x1xf32>
    %21 = arith.mulf %20, %19 : vector<1x2x1xf32>
    %22 = arith.subf %17, %21 : vector<1x2x1xf32>
    %23 = vector.shape_cast %19 : vector<1x2x1xf32> to vector<1x1x2x1xf32>
    %24 = vector.broadcast %23 : vector<1x1x2x1xf32> to vector<1x1x2x256xf32>
    %25 = arith.mulf %0, %24 : vector<1x1x2x256xf32>
    %26 = vector.shape_cast %22 : vector<1x2x1xf32> to vector<1x1x2x1xf32>
    %27 = vector.broadcast %26 : vector<1x1x2x1xf32> to vector<1x1x2x256xf32>
    %28 = arith.addf %25, %27 : vector<1x1x2x256xf32>
    %c0_13 = arith.constant 0 : index
    %c0_14 = arith.constant 0 : index
    %c0_15 = arith.constant 0 : index
    %c0_16 = arith.constant 0 : index
    %29 = vector.load %arg5[%c0_13, %c0_14, %c0_15, %c0_16] : memref<1x1x2x256xf32, #tpu.memory_space<vmem>>, vector<1x1x2x256xf32>
    tpu.vector_store %arg5[%c0_13, %c0_14, %c0_15, %c0_16], %28 {strides = array<i32>} : memref<1x1x2x256xf32, #tpu.memory_space<vmem>>, vector<1x1x2x256xf32>,
    return
  }
  func.func @transform_0(%arg0: i32, %arg1: i32) -> (i32, i32, i32, i32) {
    %c0_i32 = arith.constant 0 : i32
    %c0_i32_0 = arith.constant 0 : i32
    %c0_i32_1 = arith.constant 0 : i32
    return %arg1, %arg0, %c0_i32, %c0_i32_0 : i32, i32, i32, i32
  }
  func.func @transform_1(%arg0: i32, %arg1: i32) -> (i32, i32, i32) {
    %c0_i32 = arith.constant 0 : i32
    %c0_i32_0 = arith.constant 0 : i32
    %c0_i32_1 = arith.constant 0 : i32
    return %arg0, %c0_i32, %c0_i32_0 : i32, i32, i32
  }
  func.func @transform_2(%arg0: i32, %arg1: i32) -> (i32, i32, i32) {
    %c0_i32 = arith.constant 0 : i32
    %c0_i32_0 = arith.constant 0 : i32
    %c0_i32_1 = arith.constant 0 : i32
    return %arg0, %c0_i32, %c0_i32_0 : i32, i32, i32
  }
  func.func @transform_3(%arg0: i32, %arg1: i32) -> (i32, i32, i32, i32) {
    %c0_i32 = arith.constant 0 : i32
    %c0_i32_0 = arith.constant 0 : i32
    %c0_i32_1 = arith.constant 0 : i32
    return %arg1, %arg0, %c0_i32, %c0_i32_0 : i32, i32, i32, i32
  }
}

</mosaic_0001>

<llo_original>
// kernel: tpu_custom_call.1
$region0: #{tpu_custom_call.1}
  #allocation0 [shape = 'u32[]', space=smem, size = 0x4, offset = 0x4, fixed_abs, tag = 'smem constant byte address 0x4 - core index']
  #allocation1 [shape = 'u32[144,128]{1,0:T(1,128)}', space=vmem, size = 0x12000, scoped, tag = 'internal scratch']
  %s0 = inlined_call_operand.hbm [shape: f32[2,2,2,256], index: 0, kind: input, shape index: {}]
  %s1 = inlined_call_operand.vmem [shape: f32[2,2,1], index: 1, kind: input, shape index: {}]
  %s2 = inlined_call_operand.vmem [shape: f32[2,2,1], index: 2, kind: input, shape index: {}]
  %s3 = inlined_call_operand.hbm [shape: f32[2,2,2,256], index: 3, kind: output, shape index: {}]
  %s4 = sld [smem:[#allocation0]]
  $region49: #{tpu_custom_call.1} parent=0
    _
  %s6 = ssub.s32 1, %s4
  %s7 = scalar_select 0, %s6, %s4
  $region1: #{tpu_custom_call.1} parent=0
    #allocation2 [shape = 'u8[4096]{0}', space=vmem, size = 0x1000, scoped, tag = 'input window, operand 0']
    #allocation3 [shape = 's32[2]{0}', space=sflag, size = 0x8, scoped, tag = 'scoped memory for tpu_custom_call.1']
    #allocation4 [shape = 's32[2]{0}', space=sflag, size = 0x8, scoped, tag = 'scoped memory for tpu_custom_call.1']
    #allocation5 [shape = 'u8[4096]{0}', space=vmem, size = 0x1000, scoped, tag = 'output window, operand 0']
    %8 = vsyncpa [#allocation3], 0
    %s9 = scalar_lea.sflag [#allocation3], 1
    %10 = vsyncpa %s9, 0
    %11 = vsyncpa [#allocation4], 0
    %s12 = scalar_lea.sflag [#allocation4], 1
    %13 = vsyncpa %s12, 0
    loop: start=0, step=1, limit=6
    $region2: #{tpu_custom_call.1} parent=1 // loop_pre_header
      _
    $region3: #{tpu_custom_call.1} parent=1 // loop_header
      %s15 = sphi 0, %s19
      %p16 = scmp.ge.s32.totalorder %s15, 6
      %s22 = sphi 0, %s34
      %s23 = sphi 0, %s30
      %s24 = sphi 0, %s22
      %s25 = sphi 0, %s23
      %s26 = sphi 0, %s24
      %s27 = sphi 0, %s25
      %s39 = sphi 0, %s41
      %s42 = sphi 0, %s39
      %s43 = sphi 0, %s42
      %s59 = sphi 0, %s43
      %s65 = sphi 0, %s67
      %s68 = sphi 0, %s65
      %s69 = sphi 0, %s68
      %s85 = sphi 0, %s69
      %s91 = sphi 0, %s93
      %s94 = sphi 0, %s91
      %s95 = sphi 0, %s94
      %s111 = sphi 0, %s95
      %s119 = sphi 0, %s121
      %s122 = sphi 0, %s119
      %s123 = sphi 0, %s122
      %s139 = sphi 0, %s123
    $region4: #{tpu_custom_call.1} parent=1 // loop_header_branch
      %18 = sbr.rel (%p16) target = $region8
    $region5: #{tpu_custom_call.1} parent=1 // loop_body
      %s20 = ssub.s32 %s15, 1
      %s21 = ssub.s32 %s15, 2
      %s28 = sadd.s32 1, %s23
      %p29 = scmp.ge.s32.totalorder %s28, 2
      %s30 = scalar_select %p29, 0, %s28
      %s31 = sadd.s32 1, %s22
      %s32 = scalar_select %p29, %s31, %s22
      %p33 = scmp.ge.s32.totalorder %s32, 2
      %s34 = scalar_select %p33, 0, %s32
      %s35 = ssub.s32 %s23, %s30
      %s36 = ssub.s32 %s22, %s34
      %s37 = sor.u32 %s35, %s36
      %p38 = scmp.eq.s32.totalorder %s37, 0
      %s40 = sadd.s32 %s39, 1
      %s41 = scalar_select %p38, %s39, %s40
      %p44 = pneg %p38
      %p45 = scmp.eq.s32.totalorder %s15, 3
      %p46 = por %p44, %p45
      %p47 = scmp.ne.s32.totalorder %s39, %s42
      %p48 = scmp.eq.s32.totalorder %s15, 0
      %p49 = por %p47, %p48
      %p50 = scmp.ne.s32.totalorder %s39, %s42
      %p51 = scmp.eq.s32.totalorder %s20, 3
      %p52 = por %p50, %p51
      %p53 = scmp.ne.s32.totalorder %s42, %s43
      %p54 = scmp.eq.s32.totalorder %s20, 0
      %p55 = por %p53, %p54
      %p56 = scmp.ne.s32.totalorder %s42, %s43
      %p57 = scmp.eq.s32.totalorder %s21, 3
      %p58 = por %p56, %p57
      %p60 = scmp.ne.s32.totalorder %s43, %s59
      %p61 = scmp.eq.s32.totalorder %s21, 0
      %p62 = por %p60, %p61
      %s63 = ssub.s32 %s22, %s34
      %p64 = scmp.eq.s32.totalorder %s63, 0
      %s66 = sadd.s32 %s65, 1
      %s67 = scalar_select %p64, %s65, %s66
      %p70 = pneg %p64
      %p71 = scmp.eq.s32.totalorder %s15, 3
      %p72 = por %p70, %p71
      %p73 = scmp.ne.s32.totalorder %s65, %s68
      %p74 = scmp.eq.s32.totalorder %s15, 0
      %p75 = por %p73, %p74
      %p76 = scmp.ne.s32.totalorder %s65, %s68
      %p77 = scmp.eq.s32.totalorder %s20, 3
      %p78 = por %p76, %p77
      %p79 = scmp.ne.s32.totalorder %s68, %s69
      %p80 = scmp.eq.s32.totalorder %s20, 0
      %p81 = por %p79, %p80
      %p82 = scmp.ne.s32.totalorder %s68, %s69
      %p83 = scmp.eq.s32.totalorder %s21, 3
      %p84 = por %p82, %p83
      %p86 = scmp.ne.s32.totalorder %s69, %s85
      %p87 = scmp.eq.s32.totalorder %s21, 0
      %p88 = por %p86, %p87
      %s89 = ssub.s32 %s22, %s34
      %p90 = scmp.eq.s32.totalorder %s89, 0
      %s92 = sadd.s32 %s91, 1
      %s93 = scalar_select %p90, %s91, %s92
      %p96 = pneg %p90
      %p97 = scmp.eq.s32.totalorder %s15, 3
      %p98 = por %p96, %p97
      %p99 = scmp.ne.s32.totalorder %s91, %s94
      %p100 = scmp.eq.s32.totalorder %s15, 0
      %p101 = por %p99, %p100
      %p102 = scmp.ne.s32.totalorder %s91, %s94
      %p103 = scmp.eq.s32.totalorder %s20, 3
      %p104 = por %p102, %p103
      %p105 = scmp.ne.s32.totalorder %s94, %s95
      %p106 = scmp.eq.s32.totalorder %s20, 0
      %p107 = por %p105, %p106
      %p108 = scmp.ne.s32.totalorder %s94, %s95
      %p109 = scmp.eq.s32.totalorder %s21, 3
      %p110 = por %p108, %p109
      %p112 = scmp.ne.s32.totalorder %s95, %s111
      %p113 = scmp.eq.s32.totalorder %s21, 0
      %p114 = por %p112, %p113
      %s115 = ssub.s32 %s23, %s30
      %s116 = ssub.s32 %s22, %s34
      %s117 = sor.u32 %s115, %s116
      %p118 = scmp.eq.s32.totalorder %s117, 0
      %s120 = sadd.s32 %s119, 1
      %s121 = scalar_select %p118, %s119, %s120
      %p124 = pneg %p118
      %p125 = scmp.eq.s32.totalorder %s15, 3
      %p126 = por %p124, %p125
      %p127 = scmp.ne.s32.totalorder %s119, %s122
      %p128 = scmp.eq.s32.totalorder %s15, 0
      %p129 = por %p127, %p128
      %p130 = scmp.ne.s32.totalorder %s119, %s122
      %p131 = scmp.eq.s32.totalorder %s20, 3
      %p132 = por %p130, %p131
      %p133 = scmp.ne.s32.totalorder %s122, %s123
      %p134 = scmp.eq.s32.totalorder %s20, 0
      %p135 = por %p133, %p134
      %p136 = scmp.ne.s32.totalorder %s122, %s123
      %p137 = scmp.eq.s32.totalorder %s21, 3
      %p138 = por %p136, %p137
      %p140 = scmp.ne.s32.totalorder %s123, %s139
      %p141 = scmp.eq.s32.totalorder %s21, 0
      %p142 = por %p140, %p141
      %p143 = scmp.le.s32.totalorder 1, %s15
      %p144 = scmp.lt.s32.totalorder %s15, 5
      %p145 = pnand %p143, %p144
      %p146 = pneg %p145
      // Predicated region
      $region9: #{tpu_custom_call.1} parent=5 // pred_check
        _
      $region10: #{tpu_custom_call.1} parent=5 // pred_check_branch
        %148 = sbr.rel (%p145) target = $region12
      $region11: #{tpu_custom_call.1} parent=5 // pred_region
        %s149 = ssub.s32 %s15, 1
      $region12: #{tpu_custom_call.1} parent=5 // pred_fallthru
        _
      %p150 = scmp.lt.s32.totalorder %s15, 4
      // Predicated region
      $region13: #{tpu_custom_call.1} parent=5 // pred_check
        %p151 = pneg %p150
      $region14: #{tpu_custom_call.1} parent=5 // pred_check_branch
        %153 = sbr.rel (%p151) target = $region16
      $region15: #{tpu_custom_call.1} parent=5 // pred_region
        // Predicated region
        $region17: #{tpu_custom_call.1} parent=15 // pred_check
          %p154 = pneg %p49
        $region18: #{tpu_custom_call.1} parent=15 // pred_check_branch
          %156 = sbr.rel (%p154) target = $region20
        $region19: #{tpu_custom_call.1} parent=15 // pred_region
          %s157 = sand.u32 %s39, 1
          %s158 = scalar_lea.sflag [#allocation3], %s157
          %s159 = sand.u32 %s39, 1
          %s160 = smul.addr %s159, 4
          %s161 = scalar_lea.vmem [#allocation2], %s160
          %s163 = ssub.s32 64, 64
          %164 = vsyncadd %s158, %s163
          %s165 = smul.addr %s22, 2
          %s166 = smul.addr %s23, 4
          %s167 = sadd.s32 %s165, %s166
          %s168 = smul.addr %s167, 32
          %s169 = scalar_lea.hbm %s0, %s168
          %s171 = sshll.u32 %s161, 4
          %s172 = int_to_ptr.vmem [resolvable:$true] %s171
          %174 = dma.hbm_to_vmem [thread:$0]  %s169, 64, %s172, %s158
        $region20: #{tpu_custom_call.1} parent=15 // pred_fallthru
          _
        // Predicated region
        $region21: #{tpu_custom_call.1} parent=15 // pred_check
          %p175 = pneg %p75
        $region22: #{tpu_custom_call.1} parent=15 // pred_check_branch
          %177 = sbr.rel (%p175) target = $region24
        $region23: #{tpu_custom_call.1} parent=15 // pred_region
          %p178 = scmp.lt.s32.totalorder %s22, 1
          %s179 = scalar_select %p178, %s22, 1
          %s180 = smul.addr %s179, 2
          %s181 = scalar_lea.vmem %s1, %s180
        $region24: #{tpu_custom_call.1} parent=15 // pred_fallthru
          _
        // Predicated region
        $region25: #{tpu_custom_call.1} parent=15 // pred_check
          %p182 = pneg %p101
        $region26: #{tpu_custom_call.1} parent=15 // pred_check_branch
          %184 = sbr.rel (%p182) target = $region28
        $region27: #{tpu_custom_call.1} parent=15 // pred_region
          %p185 = scmp.lt.s32.totalorder %s22, 1
          %s186 = scalar_select %p185, %s22, 1
          %s187 = smul.addr %s186, 2
          %s188 = scalar_lea.vmem %s2, %s187
        $region28: #{tpu_custom_call.1} parent=15 // pred_fallthru
          _
      $region16: #{tpu_custom_call.1} parent=5 // pred_fallthru
        _
      %p189 = scmp.le.s32.totalorder 1, %s15
      %p190 = scmp.lt.s32.totalorder %s15, 5
      %p191 = pnand %p189, %p190
      %p192 = pneg %p191
      // Predicated region
      $region29: #{tpu_custom_call.1} parent=5 // pred_check
        _
      $region30: #{tpu_custom_call.1} parent=5 // pred_check_branch
        %194 = sbr.rel (%p191) target = $region32
      $region31: #{tpu_custom_call.1} parent=5 // pred_region
        %s195 = ssub.s32 %s15, 1
        %s196 = sand.u32 %s42, 1
        %s197 = scalar_lea.sflag [#allocation3], %s196
        %s198 = sand.u32 %s42, 1
        %s199 = smul.addr %s198, 4
        %s200 = scalar_lea.vmem [#allocation2], %s199
        // Predicated region
        $region33: #{tpu_custom_call.1} parent=31 // pred_check
          %p201 = pneg %p55
        $region34: #{tpu_custom_call.1} parent=31 // pred_check_branch
          %203 = sbr.rel (%p201) target = $region36
        $region35: #{tpu_custom_call.1} parent=31 // pred_region
          %204 = dma.done %s197, 64
        $region36: #{tpu_custom_call.1} parent=31 // pred_fallthru
          _
        %s205 = sand.u32 %s42, 1
        %s206 = scalar_lea.sflag [#allocation3], %s205
        %s207 = sand.u32 %s42, 1
        %s208 = smul.addr %s207, 4
        %s209 = scalar_lea.vmem [#allocation2], %s208
        %p210 = pneg %p55
        %p211 = pneg %p52
        %p212 = scmp.lt.s32.totalorder %s24, 1
        %s213 = scalar_select %p212, %s24, 1
        %s214 = smul.addr %s213, 2
        %s215 = scalar_lea.vmem %s1, %s214
        %p216 = pneg %p81
        %p217 = pneg %p78
        %p218 = scmp.lt.s32.totalorder %s24, 1
        %s219 = scalar_select %p218, %s24, 1
        %s220 = smul.addr %s219, 2
        %s221 = scalar_lea.vmem %s2, %s220
        %p222 = pneg %p107
        %p223 = pneg %p104
        %p224 = pneg %p135
        %p225 = pneg %p132
        %s226 = sand.u32 %s122, 1
        %s227 = scalar_lea.sflag [#allocation4], %s226
        %s228 = sand.u32 %s122, 1
        %s229 = smul.addr %s228, 4
        %s230 = scalar_lea.vmem [#allocation5], %s229
        %p231 = scmp.lt.s32.totalorder %s24, 1
        %s232 = scalar_select %p231, %s24, 1
        %s233 = smul.addr %s232, 2
        %s234 = scalar_lea.vmem %s1, %s233
        %p235 = scmp.lt.s32.totalorder %s24, 1
        %s236 = scalar_select %p235, %s24, 1
        %s237 = smul.addr %s236, 2
        %s238 = scalar_lea.vmem %s2, %s237
        %v239 = vld [vmem:[%s200] sm:$0xf]
        %v242 = vunpack.c.l.s4 1983009808
        %v243 = vunpack.c.0.s8 %v242
        %v244 = vlaneseq
        %v245 = vshrl.u32 %v244, 7
        %v246 = vsub.s32 %v243, %v245
        %v247 = vrot.slane %v239, %v246
        %v248 = vcombine.high %v247, %v247
        %vm251 = vcmask 1041408
        %v252 = vsel %vm251, %v247, 0.0
        %v253 = vsel %vm251, %v248, 0.0
        %v254 = vadd.f32 %v252, %v253
        %255 = vadd.xlane.f32.xlu0 %v254
        %v256 = vpop.xlane.xlu0 %255
        %v257 = vrot.slane %v256, 4
        %v258 = vadd.f32 %v256, %v257
        %v259 = vrot.slane %v258, 2
        %v260 = vadd.f32 %v258, %v259
        %v261 = vrot.slane %v260, 1
        %v262 = vadd.f32 %v260, %v261
        %s263 = vtos %v262
        %v264 = vmul.f32 %v239, %v239
        %v267 = vunpack.c.l.s4 1983009808
        %v268 = vunpack.c.0.s8 %v267
        %v269 = vlaneseq
        %v270 = vshrl.u32 %v269, 7
        %v271 = vsub.s32 %v268, %v270
        %v272 = vrot.slane %v264, %v271
        %v273 = vcombine.high %v272, %v272
        %v276 = vsel %vm251, %v272, 0.0
        %v277 = vsel %vm251, %v273, 0.0
        %v278 = vadd.f32 %v276, %v277
        %279 = vadd.xlane.f32.xlu0 %v278
        %v280 = vpop.xlane.xlu0 %279
        %v281 = vrot.slane %v280, 4
        %v282 = vadd.f32 %v280, %v281
        %v283 = vrot.slane %v282, 2
        %v284 = vadd.f32 %v282, %v283
        %v285 = vrot.slane %v284, 1
        %v286 = vadd.f32 %v284, %v285
        %s287 = vtos %v286
        %v288 = vrcp.pop 512.0
        %s289 = vtos %v288
        %s290 = smul.f32 %s263, %s289
        %v291 = vrcp.pop 512.0
        %s292 = vtos %v291
        %s293 = smul.f32 %s287, %s292
        %s294 = smul.f32 %s290, %s290
        %s295 = ssub.f32 %s293, %s294
        %s296 = sadd.f32 %s295, 1e-05
        %v297 = vstv %s296
        %v298 = vrsqrt.pop %v297
        %s299 = vtos %v298
        %v300 = vld [vmem:[%s234] sm:$0x3]
        %v301 = vld [vmem:[%s238] sm:$0x3]
        %v302 = vstv %s299
        %v303 = vmul.f32 %v300, %v302
        %v304 = vstv %s290
        %v305 = vmul.f32 %v304, %v303
        %v306 = vsub.f32 %v301, %v305
        %308 = vset.pattern.permute.xlu0 0
        %309 = vperm.xlu0 %308, %v303
        %v310 = vpop.permute.xlu0 %309
        %v312 = vunpack.c.l.s4 269488144
        %v313 = vunpack.c.0.s8 %v312
        %v314 = vlaneseq
        %v315 = vshrl.u32 %v314, 7
        %v316 = vsub.s32 %v313, %v315
        %v317 = vrot.slane %v310, %v316
        %v319 = vmul.f32 %v239, %v317
        %321 = vset.pattern.permute.xlu0 0
        %322 = vperm.xlu0 %321, %v306
        %v323 = vpop.permute.xlu0 %322
        %v325 = vunpack.c.l.s4 269488144
        %v326 = vunpack.c.0.s8 %v325
        %v327 = vlaneseq
        %v328 = vshrl.u32 %v327, 7
        %v329 = vsub.s32 %v326, %v328
        %v330 = vrot.slane %v323, %v329
        %v332 = vadd.f32 %v319, %v330
        %333 = vst [vmem:[%s230] sm:$0xf] %v332
        %s334 = sand.u32 %s122, 1
        %s335 = scalar_lea.sflag [#allocation4], %s334
        %s336 = sand.u32 %s122, 1
        %s337 = smul.addr %s336, 4
        %s338 = scalar_lea.vmem [#allocation5], %s337
        // Predicated region
        $region37: #{tpu_custom_call.1} parent=31 // pred_check
          %p339 = pneg %p132
        $region38: #{tpu_custom_call.1} parent=31 // pred_check_branch
          %341 = sbr.rel (%p339) target = $region40
        $region39: #{tpu_custom_call.1} parent=31 // pred_region
          %s343 = ssub.s32 64, 64
          %344 = vsyncadd %s335, %s343
          %s345 = smul.addr %s24, 2
          %s346 = smul.addr %s25, 4
          %s347 = sadd.s32 %s345, %s346
          %s348 = smul.addr %s347, 32
          %s349 = scalar_lea.hbm %s3, %s348
          %s351 = sshll.u32 %s338, 4
          %s352 = int_to_ptr.vmem [resolvable:$true] %s351
          %354 = dma.vmem_to_hbm [thread:$0]  %s352, 64, %s349, %s335
        $region40: #{tpu_custom_call.1} parent=31 // pred_fallthru
          _
      $region32: #{tpu_custom_call.1} parent=5 // pred_fallthru
        _
      %p355 = scmp.le.s32.totalorder 2, %s15
      // Predicated region
      $region41: #{tpu_custom_call.1} parent=5 // pred_check
        %p356 = pneg %p355
      $region42: #{tpu_custom_call.1} parent=5 // pred_check_branch
        %358 = sbr.rel (%p356) target = $region44
      $region43: #{tpu_custom_call.1} parent=5 // pred_region
        %s359 = ssub.s32 %s15, 2
        // Predicated region
        $region45: #{tpu_custom_call.1} parent=43 // pred_check
          %p360 = pneg %p138
        $region46: #{tpu_custom_call.1} parent=43 // pred_check_branch
          %362 = sbr.rel (%p360) target = $region48
        $region47: #{tpu_custom_call.1} parent=43 // pred_region
          %s363 = sand.u32 %s123, 1
          %s364 = scalar_lea.sflag [#allocation4], %s363
          %s365 = sand.u32 %s123, 1
          %s366 = smul.addr %s365, 4
          %s367 = scalar_lea.vmem [#allocation5], %s366
          %368 = dma.done %s364, 64
        $region48: #{tpu_custom_call.1} parent=43 // pred_fallthru
          _
      $region44: #{tpu_custom_call.1} parent=5 // pred_fallthru
        _
    $region6: #{tpu_custom_call.1} parent=1 // loop_footer
      %s19 = sadd.s32 1, %s15
    $region7: #{tpu_custom_call.1} parent=1 // loop_footer_branch
      %14 = sbr.rel target = $region3
    $region8: #{tpu_custom_call.1} parent=1 // loop_exit
      _
    %369 = vsyncpa [#allocation3], 1
    %s370 = scalar_lea.sflag [#allocation3], 1
    %371 = vsyncpa %s370, 1
    %372 = vsyncpa [#allocation4], 1
    %s373 = scalar_lea.sflag [#allocation4], 1
    %374 = vsyncpa %s373, 1

</llo_original>
